<compile_context>
chip_gen: v5e
topology: v5e:2x2
jax: 0.10.0
libtpu: 0.0.40
codegen_flags: <defaults>
</compile_context>

<pallas_src>
import functools

import jax
import jax.numpy as jnp
from jax.experimental import pallas as pl
from jax.experimental.pallas import tpu as pltpu

NUM_MEL_BINS = 80
HIDDEN_SIZE = 256


def _round_up(x, m):
    return ((x + m - 1) // m) * m


def _pitch_shifter_kernel(mel_ref, w1t_ref, b1_ref, out_ref):
    # mel_ref:  (tm, T)  f32    row tile of the flattened (B*M, T) mel matrix
    # w1t_ref:  (T, H)   bf16   fc1 weight, transposed (resident across steps)
    # b1_ref:   (1, H)   f32    fc1 bias
    # out_ref:  (tm, H)  out_dtype   relu(mel @ w1t + b1) for this row tile
    mel_bf16 = mel_ref[...].astype(jnp.bfloat16)      # in-kernel cast (free VPU pack)
    y = jnp.dot(mel_bf16, w1t_ref[...], preferred_element_type=jnp.float32)
    # Keep epilogue in f32 (v5e has no bf16 VALU path); cast only at the store.
    out_ref[...] = jnp.maximum(y + b1_ref[...], 0.0).astype(out_ref.dtype)


def prepare_params(w1, b1):
    """One-time (init-time) parameter prep, hoisted out of the per-call path.

    w1: (H, T) fc1.weight, b1: (H,) fc1.bias  ->  (T, H) bf16, (1, H) f32.
    """
    w1t = jnp.asarray(w1, jnp.bfloat16).T               # (T, H) bf16, VMEM-resident
    b1r = jnp.asarray(b1, jnp.float32).reshape(1, -1)   # (1, H) f32
    return w1t, b1r


@functools.partial(jax.jit, static_argnames=("block_rows", "out_dtype"))
def pitch_shifter_forward(mel, pitch, w1t, b1r, *, block_rows=1024,
                          out_dtype=jnp.float32):
    """mel: (B, M, T) f32, pitch: (B, P) f32 (dead), w1t: (T, H) bf16, b1r: (1, H) f32."""
    B, M, T = mel.shape
    P = pitch.shape[1]
    Tw, H = w1t.shape
    assert T == Tw, "fc1 in_features must equal mel time dim (Linear acts on last dim)"
    assert M == NUM_MEL_BINS, "slice x[:, :num_mel_bins, :] keeps exactly the mel rows only if M == num_mel_bins"
    assert P >= 2, "P == 1 would make squeeze(1) break torch.cat in the reference module"
    # pitch rows are concatenated after the mel rows and sliced off by
    # x[:, :num_mel_bins, :]; they never affect the returned tensor.
    del pitch

    BM = B * M                               # total rows fed to the GEMM
    # Row tile: >= 2 grid steps (both v7x TensorCores busy), multiple of 8,
    # capped at block_rows so big batches still use fat tiles (amortizes the
    # ~0.35 us per-step overhead on v5e/v6e).
    tm = min(block_rows, max(8, _round_up(pl.cdiv(BM, 2), 8)))
    grid = pl.cdiv(BM, tm)

    mel2 = mel.reshape(BM, T)                # leading-dim collapse: metadata-only

    out_itemsize = jnp.dtype(out_dtype).itemsize
    cost = pl.CostEstimate(
        flops=2 * BM * T * H,
        transcendentals=0,
        bytes_accessed=(mel2.size * 4 + w1t.size * 2 + b1r.size * 4
                        + BM * H * out_itemsize),
    )

    out = pl.pallas_call(
        _pitch_shifter_kernel,
        out_shape=jax.ShapeDtypeStruct((BM, H), out_dtype),
        grid_spec=pltpu.PrefetchScalarGridSpec(
            num_scalar_prefetch=0,
            grid=(grid,),
            in_specs=[
                pl.BlockSpec((tm, T), lambda i: (i, 0)),   # row tile of mel (f32)
                pl.BlockSpec((Tw, H), lambda i: (0, 0)),   # weight: constant block -> fetched once
                pl.BlockSpec((1, H), lambda i: (0, 0)),    # bias:   constant block -> fetched once
            ],
            out_specs=pl.BlockSpec((tm, H), lambda i: (i, 0)),
        ),
        compiler_params=pltpu.CompilerParams(
            dimension_semantics=("parallel",)),
        cost_estimate=cost,
    )(mel2, w1t, b1r)

    # Metadata-only reshape back to the module's (B, num_mel_bins, H).
    return out.reshape(B, M, H)


def reference_forward(mel, pitch, w1, b1):
    """Pure-JAX (f32) mirror of the PyTorch forward."""
    B, M, T = mel.shape
    P = pitch.shape[1]
    pitch_expanded = jnp.broadcast_to(pitch[:, :, None], (B, P, T))
    combined = jnp.concatenate([mel, pitch_expanded], axis=1)        # (B, M+P, T)
    x = jax.nn.relu(jnp.einsum("bct,ht->bch", combined, w1) + b1)    # Linear on last dim
    return x[:, :NUM_MEL_BINS, :]


if __name__ == "__main__":
    key = jax.random.PRNGKey(0)
    k_mel, k_pitch, k_w1, k_b1 = jax.random.split(key, 4)

    B = 2
    M = NUM_MEL_BINS              # 80 mel bins (channel dim of mel spectrogram)
    T = NUM_MEL_BINS + 1          # time dim; must equal fc1.in_features = 81
    P = 2                         # pitch_shift feature dim (>=2 so squeeze(1) is a no-op)
    H = HIDDEN_SIZE               # 256

    mel = jax.random.normal(k_mel, (B, M, T), jnp.float32)
    pitch = jax.random.normal(k_pitch, (B, P), jnp.float32)

    # Deterministic fc1 parameters (PyTorch-Linear-style uniform init).
    limit = 1.0 / jnp.sqrt(jnp.float32(T))
    w1 = jax.random.uniform(k_w1, (H, T), jnp.float32, -limit, limit)
    b1 = jax.random.uniform(k_b1, (H,), jnp.float32, -limit, limit)
    # fc2 (num_mel_bins x hidden) is defined in the PyTorch module but never
    # used in forward, so it is intentionally not materialized here.

    # One-time parameter prep (transpose/cast hoisted out of the call path).
    w1t, b1r = prepare_params(w1, b1)

    out = pitch_shifter_forward(mel, pitch, w1t, b1r)
    jax.block_until_ready(out)

    ref = reference_forward(mel, pitch, w1, b1)
    assert out.shape == (B, NUM_MEL_BINS, H), out.shape
    # bf16 MXU inputs (f32 accumulate) vs the pure-f32 reference: loose tolerance.
    assert jnp.allclose(out, ref, atol=5e-2, rtol=5e-2)

    print("KERNEL_OK")
</pallas_src>

<mosaic_0001>
module attributes {stable_mosaic.version = 11 : i64} {
  func.func @_pitch_shifter_kernel(%arg0: i32, %arg1: memref<80x81xf32, #tpu.memory_space<vmem>>, %arg2: memref<81x256xbf16, #tpu.memory_space<vmem>>, %arg3: memref<1x256xf32, #tpu.memory_space<vmem>>, %arg4: memref<80x256xf32, #tpu.memory_space<vmem>>) attributes {dimension_semantics = [#tpu.dimension_semantics<parallel>], iteration_bounds = array<i64: 2>, scalar_prefetch = 0 : i64, scratch_operands = 0 : i64, tpu.core_type = #tpu.core_type<tc>, window_params = [{transform_indices = @transform_0, window_bounds = array<i64: 80, 81>}, {pipeline_mode = #tpu.pipeline_mode<synchronous>, transform_indices = @transform_1, window_bounds = array<i64: 81, 256>}, {pipeline_mode = #tpu.pipeline_mode<synchronous>, transform_indices = @transform_2, window_bounds = array<i64: 1, 256>}, {transform_indices = @transform_3, window_bounds = array<i64: 80, 256>}]} {
    %c0 = arith.constant 0 : index
    %c0_0 = arith.constant 0 : index
    %0 = vector.load %arg1[%c0, %c0_0] : memref<80x81xf32, #tpu.memory_space<vmem>>, vector<80x81xf32>
    %1 = arith.truncf %0 : vector<80x81xf32> to vector<80x81xbf16>
    %c0_1 = arith.constant 0 : index
    %c0_2 = arith.constant 0 : index
    %2 = vector.load %arg2[%c0_1, %c0_2] : memref<81x256xbf16, #tpu.memory_space<vmem>>, vector<81x256xbf16>
    %cst = arith.constant dense<0.000000e+00> : vector<80x256xf32>
    %3 = tpu.matmul %1, %2, %cst {dimension_numbers = #tpu.dot_dimension_numbers<[1], [0], [0], [1], [0, 0, 1, 1], [], []>} : vector<80x81xbf16>, vector<81x256xbf16>, vector<80x256xf32> -> vector<80x256xf32>
    %c0_3 = arith.constant 0 : index
    %c0_4 = arith.constant 0 : index
    %4 = vector.load %arg3[%c0_3, %c0_4] : memref<1x256xf32, #tpu.memory_space<vmem>>, vector<1x256xf32>
    %5 = vector.broadcast %4 : vector<1x256xf32> to vector<80x256xf32>
    %6 = arith.addf %3, %5 : vector<80x256xf32>
    %cst_5 = arith.constant 0.000000e+00 : f32
    %7 = vector.broadcast %cst_5 : f32 to vector<80x256xf32>
    %8 = arith.maximumf %6, %7 : vector<80x256xf32>
    %c0_6 = arith.constant 0 : index
    %c0_7 = arith.constant 0 : index
    %9 = vector.load %arg4[%c0_6, %c0_7] : memref<80x256xf32, #tpu.memory_space<vmem>>, vector<80x256xf32>
    tpu.vector_store %arg4[%c0_6, %c0_7], %8 {strides = array<i32>} : memref<80x256xf32, #tpu.memory_space<vmem>>, vector<80x256xf32>,
    return
  }
  func.func @transform_0(%arg0: i32) -> (i32, i32) {
    %c0_i32 = arith.constant 0 : i32
    %c0_i32_0 = arith.constant 0 : i32
    return %arg0, %c0_i32 : i32, i32
  }
  func.func @transform_1(%arg0: i32) -> (i32, i32) {
    %c0_i32 = arith.constant 0 : i32
    %c0_i32_0 = arith.constant 0 : i32
    %c0_i32_1 = arith.constant 0 : i32
    return %c0_i32, %c0_i32_0 : i32, i32
  }
  func.func @transform_2(%arg0: i32) -> (i32, i32) {
    %c0_i32 = arith.constant 0 : i32
    %c0_i32_0 = arith.constant 0 : i32
    %c0_i32_1 = arith.constant 0 : i32
    return %c0_i32, %c0_i32_0 : i32, i32
  }
  func.func @transform_3(%arg0: i32) -> (i32, i32) {
    %c0_i32 = arith.constant 0 : i32
    %c0_i32_0 = arith.constant 0 : i32
    return %arg0, %c0_i32 : i32, i32
  }
}

</mosaic_0001>

<llo_original>
// kernel: pitch_shifter_forward.1
$region0: #{pitch_shifter_forward.1}
  #allocation0 [shape = 'u32[]', space=smem, size = 0x4, offset = 0x4, fixed_abs, tag = 'smem constant byte address 0x4 - core index']
  #allocation1 [shape = 'u32[72,128]{1,0:T(1,128)}', space=vmem, size = 0x9000, scoped, tag = 'internal scratch']
  %s0 = inlined_call_operand.hbm [shape: f32[160,81], index: 0, kind: input, shape index: {}]
  %s1 = inlined_call_operand.hbm [shape: bf16[81,256], index: 1, kind: input, shape index: {}]
  %s2 = inlined_call_operand.vmem [shape: f32[1,256], index: 2, kind: input, shape index: {}]
  %s3 = inlined_call_operand.hbm [shape: f32[160,256], index: 3, kind: output, shape index: {}]
  %s4 = sld [smem:[#allocation0]]
  $region53: #{pitch_shifter_forward.1} parent=0
    _
  %s6 = ssub.s32 1, %s4
  %s7 = scalar_select 0, %s6, %s4
  $region1: #{pitch_shifter_forward.1} parent=0
    #allocation2 [shape = 'u8[81920]{0}', space=vmem, size = 0x14000, scoped, tag = 'input window, operand 0']
    #allocation3 [shape = 's32[2]{0}', space=sflag, size = 0x8, scoped, tag = 'scoped memory for pitch_shifter_forward.1']
    #allocation4 [shape = 's32[2]{0}', space=sflag, size = 0x8, scoped, tag = 'scoped memory for pitch_shifter_forward.1']
    #allocation5 [shape = 'u8[45056]{0}', space=vmem, size = 0xb000, scoped, tag = 'input window, operand 1, single buffered']
    #allocation6 [shape = 's32[1]{0}', space=sflag, size = 0x4, scoped, tag = 'scoped memory for pitch_shifter_forward.1']
    #allocation7 [shape = 'u8[163840]{0}', space=vmem, size = 0x28000, scoped, tag = 'output window, operand 0']
    %8 = vsyncpa [#allocation3], 0
    %s9 = scalar_lea.sflag [#allocation3], 1
    %10 = vsyncpa %s9, 0
    %11 = vsyncpa [#allocation6], 0
    %12 = vsyncpa [#allocation4], 0
    %s13 = scalar_lea.sflag [#allocation4], 1
    %14 = vsyncpa %s13, 0
    loop: start=0, step=1, limit=4
    $region2: #{pitch_shifter_forward.1} parent=1 // loop_pre_header
      _
    $region3: #{pitch_shifter_forward.1} parent=1 // loop_header
      %s16 = sphi 0, %s20
      %p17 = scmp.ge.s32.totalorder %s16, 4
      %s26 = sphi 0, %s28
      %s29 = sphi 0, %s26
      %s30 = sphi 0, %s29
      %s46 = sphi 0, %s30
      %s50 = sphi 0, %s50
      %s52 = sphi 0, %s50
      %s53 = sphi 0, %s52
      %s67 = sphi 0, %s53
      %s71 = sphi 0, %s71
      %s73 = sphi 0, %s71
      %s74 = sphi 0, %s73
      %s88 = sphi 0, %s74
      %s94 = sphi 0, %s96
      %s97 = sphi 0, %s94
      %s98 = sphi 0, %s97
      %s114 = sphi 0, %s98
    $region4: #{pitch_shifter_forward.1} parent=1 // loop_header_branch
      %19 = sbr.rel (%p17) target = $region8
    $region5: #{pitch_shifter_forward.1} parent=1 // loop_body
      %s21 = ssub.s32 %s16, 1
      %s22 = ssub.s32 %s16, 2
      %s23 = sadd.s32 %s16, 1
      %s24 = ssub.s32 %s16, %s23
      %p25 = scmp.eq.s32.totalorder %s24, 0
      %s27 = sadd.s32 %s26, 1
      %s28 = scalar_select %p25, %s26, %s27
      %p31 = pneg %p25
      %p32 = scmp.eq.s32.totalorder %s16, 1
      %p33 = por %p31, %p32
      %p34 = scmp.ne.s32.totalorder %s26, %s29
      %p35 = scmp.eq.s32.totalorder %s16, 0
      %p36 = por %p34, %p35
      %p37 = scmp.ne.s32.totalorder %s26, %s29
      %p38 = scmp.eq.s32.totalorder %s21, 1
      %p39 = por %p37, %p38
      %p40 = scmp.ne.s32.totalorder %s29, %s30
      %p41 = scmp.eq.s32.totalorder %s21, 0
      %p42 = por %p40, %p41
      %p43 = scmp.ne.s32.totalorder %s29, %s30
      %p44 = scmp.eq.s32.totalorder %s22, 1
      %p45 = por %p43, %p44
      %p47 = scmp.ne.s32.totalorder %s30, %s46
      %p48 = scmp.eq.s32.totalorder %s22, 0
      %p49 = por %p47, %p48
      %s51 = sadd.s32 %s50, 1
      %p54 = scmp.eq.s32.totalorder %s16, 1
      %p55 = scmp.ne.s32.totalorder %s50, %s52
      %p56 = scmp.eq.s32.totalorder %s16, 0
      %p57 = por %p55, %p56
      %p58 = scmp.ne.s32.totalorder %s50, %s52
      %p59 = scmp.eq.s32.totalorder %s21, 1
      %p60 = por %p58, %p59
      %p61 = scmp.ne.s32.totalorder %s52, %s53
      %p62 = scmp.eq.s32.totalorder %s21, 0
      %p63 = por %p61, %p62
      %p64 = scmp.ne.s32.totalorder %s52, %s53
      %p65 = scmp.eq.s32.totalorder %s22, 1
      %p66 = por %p64, %p65
      %p68 = scmp.ne.s32.totalorder %s53, %s67
      %p69 = scmp.eq.s32.totalorder %s22, 0
      %p70 = por %p68, %p69
      %s72 = sadd.s32 %s71, 1
      %p75 = scmp.eq.s32.totalorder %s16, 1
      %p76 = scmp.ne.s32.totalorder %s71, %s73
      %p77 = scmp.eq.s32.totalorder %s16, 0
      %p78 = por %p76, %p77
      %p79 = scmp.ne.s32.totalorder %s71, %s73
      %p80 = scmp.eq.s32.totalorder %s21, 1
      %p81 = por %p79, %p80
      %p82 = scmp.ne.s32.totalorder %s73, %s74
      %p83 = scmp.eq.s32.totalorder %s21, 0
      %p84 = por %p82, %p83
      %p85 = scmp.ne.s32.totalorder %s73, %s74
      %p86 = scmp.eq.s32.totalorder %s22, 1
      %p87 = por %p85, %p86
      %p89 = scmp.ne.s32.totalorder %s74, %s88
      %p90 = scmp.eq.s32.totalorder %s22, 0
      %p91 = por %p89, %p90
      %s92 = ssub.s32 %s16, %s23
      %p93 = scmp.eq.s32.totalorder %s92, 0
      %s95 = sadd.s32 %s94, 1
      %s96 = scalar_select %p93, %s94, %s95
      %p99 = pneg %p93
      %p100 = scmp.eq.s32.totalorder %s16, 1
      %p101 = por %p99, %p100
      %p102 = scmp.ne.s32.totalorder %s94, %s97
      %p103 = scmp.eq.s32.totalorder %s16, 0
      %p104 = por %p102, %p103
      %p105 = scmp.ne.s32.totalorder %s94, %s97
      %p106 = scmp.eq.s32.totalorder %s21, 1
      %p107 = por %p105, %p106
      %p108 = scmp.ne.s32.totalorder %s97, %s98
      %p109 = scmp.eq.s32.totalorder %s21, 0
      %p110 = por %p108, %p109
      %p111 = scmp.ne.s32.totalorder %s97, %s98
      %p112 = scmp.eq.s32.totalorder %s22, 1
      %p113 = por %p111, %p112
      %p115 = scmp.ne.s32.totalorder %s98, %s114
      %p116 = scmp.eq.s32.totalorder %s22, 0
      %p117 = por %p115, %p116
      %p118 = scmp.le.s32.totalorder 1, %s16
      %p119 = scmp.lt.s32.totalorder %s16, 3
      %p120 = pnand %p118, %p119
      %p121 = pneg %p120
      // Predicated region
      $region9: #{pitch_shifter_forward.1} parent=5 // pred_check
        _
      $region10: #{pitch_shifter_forward.1} parent=5 // pred_check_branch
        %123 = sbr.rel (%p120) target = $region12
      $region11: #{pitch_shifter_forward.1} parent=5 // pred_region
        %s124 = ssub.s32 %s16, 1
        // Predicated region
        $region13: #{pitch_shifter_forward.1} parent=11 // pred_check
          %p125 = pneg %p63
        $region14: #{pitch_shifter_forward.1} parent=11 // pred_check_branch
          %127 = sbr.rel (%p125) target = $region16
        $region15: #{pitch_shifter_forward.1} parent=11 // pred_region
          %129 = vsyncadd [#allocation6], 0
          %s130 = sshll.u32 %s1, 4
          %s131 = int_to_ptr.hbm [resolvable:$true] %s130
          %s132 = sshll.u32 [#allocation5], 4
          %s133 = int_to_ptr.vmem [resolvable:$true] %s132
          %138 = dma.hbm_to_vmem [thread:$0]  %s131, 1408, %s133, [#allocation6], 128, 128, 8
        $region16: #{pitch_shifter_forward.1} parent=11 // pred_fallthru
          _
        // Predicated region
        $region17: #{pitch_shifter_forward.1} parent=11 // pred_check
          %p139 = pneg %p84
        $region18: #{pitch_shifter_forward.1} parent=11 // pred_check_branch
          %141 = sbr.rel (%p139) target = $region20
        $region19: #{pitch_shifter_forward.1} parent=11 // pred_region
          _
        $region20: #{pitch_shifter_forward.1} parent=11 // pred_fallthru
          _
      $region12: #{pitch_shifter_forward.1} parent=5 // pred_fallthru
        _
      %p142 = scmp.lt.s32.totalorder %s16, 2
      // Predicated region
      $region21: #{pitch_shifter_forward.1} parent=5 // pred_check
        %p143 = pneg %p142
      $region22: #{pitch_shifter_forward.1} parent=5 // pred_check_branch
        %145 = sbr.rel (%p143) target = $region24
      $region23: #{pitch_shifter_forward.1} parent=5 // pred_region
        // Predicated region
        $region25: #{pitch_shifter_forward.1} parent=23 // pred_check
          %p146 = pneg %p36
        $region26: #{pitch_shifter_forward.1} parent=23 // pred_check_branch
          %148 = sbr.rel (%p146) target = $region28
        $region27: #{pitch_shifter_forward.1} parent=23 // pred_region
          %s149 = sand.u32 %s26, 1
          %s150 = scalar_lea.sflag [#allocation3], %s149
          %s151 = sand.u32 %s26, 1
          %s152 = smul.addr %s151, 80
          %s153 = scalar_lea.vmem [#allocation2], %s152
          %s154 = smul.u32 10, %s16
          %156 = vsyncadd %s150, 0
          %s157 = smul.addr %s154, 8
          %s158 = scalar_lea.hbm %s0, %s157
          %s159 = sshll.u32 %s158, 4
          %s160 = int_to_ptr.hbm [resolvable:$true] %s159
          %s161 = sshll.u32 %s153, 4
          %s162 = int_to_ptr.vmem [resolvable:$true] %s161
          %167 = dma.hbm_to_vmem [thread:$0]  %s160, 1280, %s162, %s150, 128, 128, 8
        $region28: #{pitch_shifter_forward.1} parent=23 // pred_fallthru
          _
      $region24: #{pitch_shifter_forward.1} parent=5 // pred_fallthru
        _
      %p168 = scmp.le.s32.totalorder 1, %s16
      %p169 = scmp.lt.s32.totalorder %s16, 3
      %p170 = pnand %p168, %p169
      %p171 = pneg %p170
      // Predicated region
      $region29: #{pitch_shifter_forward.1} parent=5 // pred_check
        _
      $region30: #{pitch_shifter_forward.1} parent=5 // pred_check_branch
        %173 = sbr.rel (%p170) target = $region32
      $region31: #{pitch_shifter_forward.1} parent=5 // pred_region
        %s174 = ssub.s32 %s16, 1
        %s175 = sand.u32 %s29, 1
        %s176 = scalar_lea.sflag [#allocation3], %s175
        %s177 = sand.u32 %s29, 1
        %s178 = smul.addr %s177, 80
        %s179 = scalar_lea.vmem [#allocation2], %s178
        // Predicated region
        $region33: #{pitch_shifter_forward.1} parent=31 // pred_check
          %p180 = pneg %p42
        $region34: #{pitch_shifter_forward.1} parent=31 // pred_check_branch
          %182 = sbr.rel (%p180) target = $region36
        $region35: #{pitch_shifter_forward.1} parent=31 // pred_region
          %184 = dma.done %s176, 1280
        $region36: #{pitch_shifter_forward.1} parent=31 // pred_fallthru
          _
        // Predicated region
        $region37: #{pitch_shifter_forward.1} parent=31 // pred_check
          %p185 = pneg %p63
        $region38: #{pitch_shifter_forward.1} parent=31 // pred_check_branch
          %187 = sbr.rel (%p185) target = $region40
        $region39: #{pitch_shifter_forward.1} parent=31 // pred_region
          %189 = dma.done [#allocation6], 1408
        $region40: #{pitch_shifter_forward.1} parent=31 // pred_fallthru
          _
        %s190 = sand.u32 %s29, 1
        %s191 = scalar_lea.sflag [#allocation3], %s190
        %s192 = sand.u32 %s29, 1
        %s193 = smul.addr %s192, 80
        %s194 = scalar_lea.vmem [#allocation2], %s193
        %p195 = pneg %p42
        %p196 = pneg %p39
        %p197 = pneg %p63
        %p198 = pneg %p60
        %p199 = pneg %p84
        %p200 = pneg %p81
        %p201 = pneg %p110
        %p202 = pneg %p107
        %s203 = sand.u32 %s97, 1
        %s204 = scalar_lea.sflag [#allocation4], %s203
        %s205 = sand.u32 %s97, 1
        %s206 = smul.addr %s205, 160
        %s207 = scalar_lea.vmem [#allocation7], %s206
        %s208 = smul.u32 10, %s21
        %s209 = smul.u32 10, %s21
        %v211 = vld [vmem:[%s179] sm:$0xff]
        %v212 = vld [vmem:[%s179 + $0x8] sm:$0xff]
        %v213 = vld [vmem:[%s179 + $0x10] sm:$0xff]
        %v214 = vld [vmem:[%s179 + $0x18] sm:$0xff]
        %v215 = vld [vmem:[%s179 + $0x20] sm:$0xff]
        %v216 = vld [vmem:[%s179 + $0x28] sm:$0xff]
        %v217 = vld [vmem:[%s179 + $0x30] sm:$0xff]
        %v218 = vld [vmem:[%s179 + $0x38] sm:$0xff]
        %v219 = vld [vmem:[%s179 + $0x40] sm:$0xff]
        %v220 = vld [vmem:[%s179 + $0x48] sm:$0xff]
        %v221 = vpack.c.bf16 %v212, %v211
        %v222 = vpack.c.bf16 %v214, %v213
        %v223 = vpack.c.bf16 %v216, %v215
        %v224 = vpack.c.bf16 %v218, %v217
        %v225 = vpack.c.bf16 %v220, %v219
        %v226 = vld [vmem:[#allocation5] sm:$0xff]
        %v227 = vld [vmem:[#allocation5 + $0x8] sm:$0xff]
        %v228 = vld [vmem:[#allocation5 + $0x10] sm:$0xff]
        %v229 = vld [vmem:[#allocation5 + $0x18] sm:$0xff]
        %v230 = vld [vmem:[#allocation5 + $0x20] sm:$0xff]
        %v231 = vld [vmem:[#allocation5 + $0x28] sm:$0xff]
        %v232 = vld [vmem:[#allocation5 + $0x30] sm:$0xff]
        %v233 = vld [vmem:[#allocation5 + $0x38] sm:$0xff]
        %v234 = vld [vmem:[#allocation5 + $0x40] sm:$0xff]
        %v235 = vld [vmem:[#allocation5 + $0x48] sm:$0xff]
        %v236 = vld [vmem:[#allocation5 + $0x50] sm:$0x11]
        %v237 = vld [vmem:[%s2] sm:$0x3]
        %v239 = vperm.slane %v237, 0
        %v240 = vperm.slane %v237, 1
        %v254 = vunpack.c.l.b16 %v226
        %v255 = vunpack.c.h.b16 %v226
        %v256 = vunpack.c.l.b16 %v227
        %v257 = vunpack.c.h.b16 %v227
        %v258 = vunpack.c.l.b16 %v228
        %v259 = vunpack.c.h.b16 %v228
        %v260 = vunpack.c.l.b16 %v229
        %v261 = vunpack.c.h.b16 %v229
        %v262 = vunpack.c.l.b16 %v230
        %v263 = vunpack.c.h.b16 %v230
        %v264 = vunpack.c.l.b16 %v231
        %v265 = vunpack.c.h.b16 %v231
        %v266 = vunpack.c.l.b16 %v232
        %v267 = vunpack.c.h.b16 %v232
        %v268 = vunpack.c.l.b16 %v233
        %v269 = vunpack.c.h.b16 %v233
        %v270 = vunpack.c.l.b16 %v234
        %v271 = vunpack.c.h.b16 %v234
        %v272 = vunpack.c.l.b16 %v235
        %v273 = vunpack.c.h.b16 %v235
        %v274 = vunpack.c.l.b16 %v236
        %v275 = vunpack.c.h.b16 %v236
        %v276 = vpack.c.b16 %v256, %v254
        %v277 = vpack.c.b16 %v257, %v255
        %v278 = vpack.c.b16 %v260, %v258
        %v279 = vpack.c.b16 %v261, %v259
        %v280 = vpack.c.b16 %v264, %v262
        %v281 = vpack.c.b16 %v265, %v263
        %v282 = vpack.c.b16 %v268, %v266
        %v283 = vpack.c.b16 %v269, %v267
        %v284 = vpack.c.b16 %v272, %v270
        %v285 = vpack.c.b16 %v273, %v271
        %v286 = vpack.c.b16 %v274, %v274
        %v287 = vpack.c.b16 %v275, %v275
        %vm298 = vcmask 662528
        %v300 = vsel %vm298, %v221, 0
        %v303 = vsel %vm298, %v222, 0
        %v306 = vsel %vm298, %v223, 0
        %v309 = vsel %vm298, %v224, 0
        %v312 = vsel %vm298, %v225, 0
        %vm314 = vcmask 1040384
        %v315 = vsel 0, 4294967295, 65535
        %v316 = vsel %vm314, %v315, 0
        %v318 = vand.u32 %v286, %v316
        %v321 = vand.u32 %v287, %v316
        %323 = vmatpush.bf16.msra.mxu0 0
        %324 = vmatpush.bf16.msra.mxu0 0
        %325 = vmatpush.bf16.msra.mxu0 %v318
        %326 = vmatpush.bf16.msra.mxu0 %v284
        %327 = vmatpush.bf16.msra.mxu0 %v282
        %328 = vmatpush.bf16.msra.mxu0 %v280
        %329 = vmatpush.bf16.msra.mxu0 %v278
        %330 = vmatpush.bf16.msra.mxu0 %v276
        %331 = vmatmul.bf16.gmra.mxu0 %v300
        %v332 = vpop.f32.mrf.mxu0
        %v333 = vadd.f32 %v239, %v332
        %v334 = vpop.f32.mrf.mxu0
        %v335 = vadd.f32 %v239, %v334
        %336 = vmatmul.bf16.gmra.mxu0 %v303
        %v337 = vpop.f32.mrf.mxu0
        %v338 = vadd.f32 %v239, %v337
        %v339 = vpop.f32.mrf.mxu0
        %v340 = vadd.f32 %v239, %v339
        %341 = vmatmul.bf16.gmra.mxu0 %v306
        %v342 = vpop.f32.mrf.mxu0
        %v343 = vadd.f32 %v239, %v342
        %v344 = vpop.f32.mrf.mxu0
        %v345 = vadd.f32 %v239, %v344
        %346 = vmatmul.bf16.gmra.mxu0 %v309
        %v347 = vpop.f32.mrf.mxu0
        %v348 = vadd.f32 %v239, %v347
        %v349 = vpop.f32.mrf.mxu0
        %v350 = vadd.f32 %v239, %v349
        %351 = vmatmul.bf16.gmra.mxu0 %v312
        %v352 = vpop.f32.mrf.mxu0
        %v353 = vadd.f32 %v239, %v352
        %v354 = vpop.f32.mrf.mxu0
        %v355 = vadd.f32 %v239, %v354
        %356 = vdwg.mxu0
        %357 = vmatpush.bf16.msra.mxu0 0
        %358 = vmatpush.bf16.msra.mxu0 0
        %359 = vmatpush.bf16.msra.mxu0 %v321
        %360 = vmatpush.bf16.msra.mxu0 %v285
        %361 = vmatpush.bf16.msra.mxu0 %v283
        %362 = vmatpush.bf16.msra.mxu0 %v281
        %363 = vmatpush.bf16.msra.mxu0 %v279
        %364 = vmatpush.bf16.msra.mxu0 %v277
        %365 = vmatmul.bf16.gmra.mxu0 %v300
        %v366 = vpop.f32.mrf.mxu0
        %v367 = vadd.f32 %v240, %v366
        %v368 = vpop.f32.mrf.mxu0
        %v369 = vadd.f32 %v240, %v368
        %370 = vmatmul.bf16.gmra.mxu0 %v303
        %v371 = vpop.f32.mrf.mxu0
        %v372 = vadd.f32 %v240, %v371
        %v373 = vpop.f32.mrf.mxu0
        %v374 = vadd.f32 %v240, %v373
        %375 = vmatmul.bf16.gmra.mxu0 %v306
        %v376 = vpop.f32.mrf.mxu0
        %v377 = vadd.f32 %v240, %v376
        %v378 = vpop.f32.mrf.mxu0
        %v379 = vadd.f32 %v240, %v378
        %380 = vmatmul.bf16.gmra.mxu0 %v309
        %v381 = vpop.f32.mrf.mxu0
        %v382 = vadd.f32 %v240, %v381
        %v383 = vpop.f32.mrf.mxu0
        %v384 = vadd.f32 %v240, %v383
        %385 = vmatmul.bf16.gmra.mxu0 %v312
        %v386 = vpop.f32.mrf.mxu0
        %v387 = vadd.f32 %v240, %v386
        %v388 = vpop.f32.mrf.mxu0
        %v389 = vadd.f32 %v240, %v388
        %390 = vdwg.mxu0
        %v391 = vmax.f32 %v333, 0.0
        %v392 = vmax.f32 %v367, 0.0
        %v393 = vmax.f32 %v335, 0.0
        %v394 = vmax.f32 %v369, 0.0
        %v395 = vmax.f32 %v338, 0.0
        %v396 = vmax.f32 %v372, 0.0
        %v397 = vmax.f32 %v340, 0.0
        %v398 = vmax.f32 %v374, 0.0
        %v399 = vmax.f32 %v343, 0.0
        %v400 = vmax.f32 %v377, 0.0
        %v401 = vmax.f32 %v345, 0.0
        %v402 = vmax.f32 %v379, 0.0
        %v403 = vmax.f32 %v348, 0.0
        %v404 = vmax.f32 %v382, 0.0
        %v405 = vmax.f32 %v350, 0.0
        %v406 = vmax.f32 %v384, 0.0
        %v407 = vmax.f32 %v353, 0.0
        %v408 = vmax.f32 %v387, 0.0
        %v409 = vmax.f32 %v355, 0.0
        %v410 = vmax.f32 %v389, 0.0
        %411 = vst [vmem:[%s207] sm:$0xff] %v391
        %412 = vst [vmem:[%s207 + $0x8] sm:$0xff] %v392
        %413 = vst [vmem:[%s207 + $0x10] sm:$0xff] %v393
        %414 = vst [vmem:[%s207 + $0x18] sm:$0xff] %v394
        %415 = vst [vmem:[%s207 + $0x20] sm:$0xff] %v395
        %416 = vst [vmem:[%s207 + $0x28] sm:$0xff] %v396
        %417 = vst [vmem:[%s207 + $0x30] sm:$0xff] %v397
        %418 = vst [vmem:[%s207 + $0x38] sm:$0xff] %v398
        %419 = vst [vmem:[%s207 + $0x40] sm:$0xff] %v399
        %420 = vst [vmem:[%s207 + $0x48] sm:$0xff] %v400
        %421 = vst [vmem:[%s207 + $0x50] sm:$0xff] %v401
        %422 = vst [vmem:[%s207 + $0x58] sm:$0xff] %v402
        %423 = vst [vmem:[%s207 + $0x60] sm:$0xff] %v403
        %424 = vst [vmem:[%s207 + $0x68] sm:$0xff] %v404
        %425 = vst [vmem:[%s207 + $0x70] sm:$0xff] %v405
        %426 = vst [vmem:[%s207 + $0x78] sm:$0xff] %v406
        %427 = vst [vmem:[%s207 + $0x80] sm:$0xff] %v407
        %428 = vst [vmem:[%s207 + $0x88] sm:$0xff] %v408
        %429 = vst [vmem:[%s207 + $0x90] sm:$0xff] %v409
        %430 = vst [vmem:[%s207 + $0x98] sm:$0xff] %v410
        %s431 = sand.u32 %s97, 1
        %s432 = scalar_lea.sflag [#allocation4], %s431
        %s433 = sand.u32 %s97, 1
        %s434 = smul.addr %s433, 160
        %s435 = scalar_lea.vmem [#allocation7], %s434
        // Predicated region
        $region41: #{pitch_shifter_forward.1} parent=31 // pred_check
          %p436 = pneg %p107
        $region42: #{pitch_shifter_forward.1} parent=31 // pred_check_branch
          %438 = sbr.rel (%p436) target = $region44
        $region43: #{pitch_shifter_forward.1} parent=31 // pred_region
          %s439 = smul.u32 10, %s21
          %441 = vsyncadd %s432, 0
          %s442 = smul.addr %s439, 2
          %s443 = smul.addr %s442, 8
          %s444 = scalar_lea.hbm %s3, %s443
          %s445 = sshll.u32 %s435, 4
          %s446 = int_to_ptr.vmem [resolvable:$true] %s445
          %s447 = sshll.u32 %s444, 4
          %s448 = int_to_ptr.hbm [resolvable:$true] %s447
          %453 = dma.vmem_to_hbm [thread:$0]  %s446, 2560, %s448, %s432, 256, 256, 16
        $region44: #{pitch_shifter_forward.1} parent=31 // pred_fallthru
          _
      $region32: #{pitch_shifter_forward.1} parent=5 // pred_fallthru
        _
      %p454 = scmp.le.s32.totalorder 2, %s16
      // Predicated region
      $region45: #{pitch_shifter_forward.1} parent=5 // pred_check
        %p455 = pneg %p454
      $region46: #{pitch_shifter_forward.1} parent=5 // pred_check_branch
        %457 = sbr.rel (%p455) target = $region48
      $region47: #{pitch_shifter_forward.1} parent=5 // pred_region
        %s458 = ssub.s32 %s16, 2
        // Predicated region
        $region49: #{pitch_shifter_forward.1} parent=47 // pred_check
          %p459 = pneg %p113
        $region50: #{pitch_shifter_forward.1} parent=47 // pred_check_branch
          %461 = sbr.rel (%p459) target = $region52
        $region51: #{pitch_shifter_forward.1} parent=47 // pred_region
          %s462 = sand.u32 %s98, 1
          %s463 = scalar_lea.sflag [#allocation4], %s462
          %s464 = sand.u32 %s98, 1
          %s465 = smul.addr %s464, 160
          %s466 = scalar_lea.vmem [#allocation7], %s465
          %468 = dma.done %s463, 2560
        $region52: #{pitch_shifter_forward.1} parent=47 // pred_fallthru
          _
      $region48: #{pitch_shifter_forward.1} parent=5 // pred_fallthru
        _
    $region6: #{pitch_shifter_forward.1} parent=1 // loop_footer
      %s20 = sadd.s32 1, %s16
    $region7: #{pitch_shifter_forward.1} parent=1 // loop_footer_branch
      %15 = sbr.rel target = $region3
    $region8: #{pitch_shifter_forward.1} parent=1 // loop_exit
      _
    %469 = vsyncpa [#allocation3], 1
    %s470 = scalar_lea.sflag [#allocation3], 1
    %471 = vsyncpa %s470, 1
    %472 = vsyncpa [#allocation6], 1
    %473 = vsyncpa [#allocation4], 1
    %s474 = scalar_lea.sflag [#allocation4], 1
    %475 = vsyncpa %s474, 1

</llo_original>
